<compile_context>
chip_gen: v6e
topology: v6e:2x2x1
jax: 0.10.0
libtpu: 0.0.40
codegen_flags: <defaults>
</compile_context>

<pallas_src>
import functools

import jax
import jax.numpy as jnp
from jax.experimental import pallas as pl
from jax.experimental.pallas import tpu as pltpu


# ----------------------------- Pallas kernel ------------------------------ #
def acnn_kernel(x_emb_ref, e12_ref, xcat_ref, wh_ref, b_ref, u_ref, rw_ref,
                wo_ref, rpad_ref, *, matmul_dtype, approx_recip):
    TB, N, _ = x_emb_ref.shape
    D = xcat_ref.shape[2]
    DC = b_ref.shape[1]
    K = wh_ref.shape[1] // DC
    P = (K - 1) // 2
    NP8 = rpad_ref.shape[1]          # N + 2P rounded up to a sublane multiple

    def mm(a, b):                    # 2-D MXU matmul with f32 accumulation
        return jnp.dot(a.astype(matmul_dtype), b.astype(matmul_dtype),
                       preferred_element_type=jnp.float32)

    def softmax_seq(s):              # softmax over the sequence axis (dim 1)
        m = jnp.max(s, axis=1, keepdims=True)
        e = jnp.exp(s - m)
        inv = pl.reciprocal(jnp.sum(e, axis=1, keepdims=True),
                            approx=approx_recip)
        return e * inv               # multiply-by-reciprocal, no VPU divide

    x_emb = x_emb_ref[...]           # (TB, N, DW)
    e12 = e12_ref[...]               # (TB, 2, DW)   -- e1 and e2 stacked
    x_cat = xcat_ref[...]            # (TB, N, D)

    # ---- input attention: both entity scores in one batched matmul ----
    s = jnp.einsum("bnd,bed->bne",
                   x_emb.astype(matmul_dtype), e12.astype(matmul_dtype),
                   preferred_element_type=jnp.float32)            # (TB, N, 2)
    in_aw = 0.5 * jnp.sum(softmax_seq(s), axis=2, keepdims=True)  # (TB, N, 1)
    R = x_cat * in_aw                                             # (TB, N, D)

    # ---- conv as ONE matmul: (TB*NP8, D) @ (D, K*DC) ----
    # Store R at row offset P.  The pad rows of the staging buffer are never
    # written/zeroed -- output rows that would read them are masked out below,
    # so there is no zeroing traffic and no cross-step scratch dependency.
    rpad_ref[:, P:P + N, :] = R
    y = mm(rpad_ref[...].reshape(TB * NP8, D), wh_ref[...])       # (TB*NP8, K*DC)
    y = y.reshape(TB, NP8, K * DC)

    nidx = jax.lax.broadcasted_iota(jnp.int32, (TB, N, DC), 1)
    acc = jnp.broadcast_to(b_ref[...], (TB, N, DC)).astype(jnp.float32)
    for k in range(K):               # K is small & static
        contrib = y[:, k:k + N, k * DC:(k + 1) * DC]              # (TB, N, DC)
        if k != P:                   # rows sourced from uninitialized pad rows
            valid = (nidx >= P - k) & (nidx < P + N - k)
            contrib = jnp.where(valid, contrib, 0.0)
        acc = acc + contrib
    r_star_t = jnp.tanh(acc)                                      # (TB, N, DC)

    # ---- attentive pooling ----
    h2 = r_star_t.reshape(TB * N, DC)
    g = mm(mm(h2, u_ref[...]), rw_ref[...]).reshape(TB, N, DC)
    ap = softmax_seq(g)
    wo_ref[...] = jnp.max(r_star_t * ap, axis=1)                  # (TB, DC)


# ------------------------------- wrapper ---------------------------------- #
def acnn_forward(params, input_tuple, *, block_b=8,
                 matmul_dtype=jnp.float32, approx_recip=False):
    x, e1, _e1d2, e2, _e2d1, _zd, d1, d2 = input_tuple   # unused slots as in torch
    emb = params["x_embedding"]        # (V, DW)
    demb = params["dist_embedding"]    # (NP, DP)

    x_emb = emb[x]                                          # (B, N, DW)
    e12_emb = emb[jnp.concatenate([e1, e2], axis=1)]        # (B, 2, DW)
    x_cat = jnp.concatenate([x_emb, demb[d1], demb[d2]], axis=2)   # (B, N, D)

    B, N, DW = x_emb.shape
    D = x_cat.shape[2]
    Wc = params["conv_w"]              # (K, D, DC)  (torch (DC,1,K,D) transposed)
    bc = params["conv_b"]              # (1, DC)
    U = params["U"]                    # (DC, NR)
    RW = params["rel_weight"]          # (NR, DC)
    K, _, DC = Wc.shape
    NR = U.shape[1]
    P = (K - 1) // 2
    assert N % 8 == 0, "sequence length N must be a multiple of 8 (sublane tile)"

    # conv weight for the fused matmul: column block k holds W[k]  -> (D, K*DC)
    Wh = jnp.transpose(Wc, (1, 0, 2)).reshape(D, K * DC)

    # batch blocking: TB items per grid step; pad B up to a multiple of TB.
    TB = min(block_b, B)
    G = pl.cdiv(B, TB)
    Bp = G * TB
    if Bp != B:
        pad = ((0, Bp - B), (0, 0), (0, 0))
        x_emb = jnp.pad(x_emb, pad)
        e12_emb = jnp.pad(e12_emb, pad)
        x_cat = jnp.pad(x_cat, pad)

    NP8 = ((N + 2 * P + 7) // 8) * 8   # padded-R rows rounded to the sublane tile

    kernel = functools.partial(acnn_kernel, matmul_dtype=matmul_dtype,
                               approx_recip=approx_recip)
    wo = pl.pallas_call(
        kernel,
        out_shape=jax.ShapeDtypeStruct((Bp, DC), jnp.float32),
        grid=(G,),
        in_specs=[
            pl.BlockSpec((TB, N, DW), lambda b: (b, 0, 0)),
            pl.BlockSpec((TB, 2, DW), lambda b: (b, 0, 0)),
            pl.BlockSpec((TB, N, D), lambda b: (b, 0, 0)),
            pl.BlockSpec((D, K * DC), lambda b: (0, 0)),
            pl.BlockSpec((1, DC), lambda b: (0, 0)),
            pl.BlockSpec((DC, NR), lambda b: (0, 0)),
            pl.BlockSpec((NR, DC), lambda b: (0, 0)),
        ],
        out_specs=pl.BlockSpec((TB, DC), lambda b: (b, 0)),
        scratch_shapes=[pltpu.VMEM((TB, NP8, D), jnp.float32)],
        # NOTE(v7x): when scaling to real ACNN sizes also tile the N axis and
        # set pltpu.CompilerParams(vmem_limit_bytes=...) against 64 MiB VMEM.
        compiler_params=pltpu.CompilerParams(
            dimension_semantics=("parallel",)),
    )(x_emb, e12_emb, x_cat, Wh, bc, U, RW)

    return wo[:B], RW                  # matches torch: (wo, rel_weight)


# --------------------------- pure-JAX reference ---------------------------- #
def acnn_ref(params, input_tuple):
    x, e1, _, e2, _, _, d1, d2 = input_tuple
    emb, demb = params["x_embedding"], params["dist_embedding"]
    x_emb, e1_emb, e2_emb = emb[x], emb[e1], emb[e2]
    x_cat = jnp.concatenate([x_emb, demb[d1], demb[d2]], axis=2)
    a1 = jax.nn.softmax(jnp.einsum("bnd,bmd->bnm", x_emb, e1_emb), axis=1)
    a2 = jax.nn.softmax(jnp.einsum("bnd,bmd->bnm", x_emb, e2_emb), axis=1)
    R = x_cat * (0.5 * (a1 + a2))
    Wc, bc, U, RW = params["conv_w"], params["conv_b"], params["U"], params["rel_weight"]
    K, D, DC = Wc.shape
    N = R.shape[1]
    P = (K - 1) // 2
    Rp = jnp.pad(R, ((0, 0), (P, P), (0, 0)))
    acc = jnp.broadcast_to(bc[None], (R.shape[0], N, DC))
    for k in range(K):
        acc = acc + jnp.einsum("bnd,dc->bnc", Rp[:, k:k + N, :], Wc[k])
    r_star_t = jnp.tanh(acc)                       # (B, N, DC) == R_star^T
    g = (r_star_t @ U) @ RW
    ap = jax.nn.softmax(g, axis=1)
    wo = jnp.max(r_star_t * ap, axis=1)            # (B, DC)
    return wo, RW


# --------------------------------- main ------------------------------------ #
if __name__ == "__main__":
    # small, forward-consistent hyperparameters
    B, N = 2, 8          # batch, sequence length (opt.N)
    V, DW = 20, 16       # vocab, word-embedding dim
    DP, NP = 4, 16       # dist-embedding dim, #positions (opt.DP, opt.NP)
    K, DC, NR = 3, 8, 4  # conv window, conv channels, #relations
    D = DW + 2 * DP

    key = jax.random.PRNGKey(0)
    ks = jax.random.split(key, 10)
    params = {
        "x_embedding":    jax.random.normal(ks[0], (V, DW), jnp.float32),
        "dist_embedding": jax.random.normal(ks[1], (NP, DP), jnp.float32),
        "rel_weight":     jax.random.normal(ks[2], (NR, DC), jnp.float32),
        "U":              jax.random.normal(ks[3], (DC, NR), jnp.float32),
        "conv_w":         0.1 * jax.random.normal(ks[4], (K, D, DC), jnp.float32),
        "conv_b":         0.1 * jax.random.normal(ks[5], (1, DC), jnp.float32),
    }
    # TODO(synk): nn.Dropout(opt.KP) is declared in __init__ but never applied in forward; omitted.

    x  = jax.random.randint(ks[6], (B, N), 0, V, jnp.int32)
    e1 = jax.random.randint(ks[7], (B, 1), 0, V, jnp.int32)
    e2 = jax.random.randint(ks[8], (B, 1), 0, V, jnp.int32)
    d1 = jax.random.randint(ks[9], (B, N), 0, NP, jnp.int32)
    d2 = jax.random.randint(ks[9], (B, N), 0, NP, jnp.int32)
    zd = jnp.zeros((B, N), jnp.int32)                 # unused by forward
    input_tuple = (x, e1, zd, e2, zd, zd, d1, d2)

    # exact path (f32 matmuls, exact reciprocal) -- strict check vs. reference
    wo, rel_w = jax.block_until_ready(acnn_forward(params, input_tuple))
    wo_ref, _ = acnn_ref(params, input_tuple)
    assert wo.shape == (B, DC) and rel_w.shape == (NR, DC)
    assert jnp.allclose(wo, wo_ref, atol=1e-4, rtol=1e-4), (wo, wo_ref)

    # fast path recommended for v6e/v7x (bf16 MXU operands + approx EUP
    # reciprocal).  Accuracy is model/tolerance dependent (per review), so it
    # is only sanity-checked here, not held to the 1e-4 bound.
    wo_fast, _ = jax.block_until_ready(
        acnn_forward(params, input_tuple,
                     matmul_dtype=jnp.bfloat16, approx_recip=True))
    assert wo_fast.shape == (B, DC)
    assert bool(jnp.all(jnp.isfinite(wo_fast)))
    assert float(jnp.max(jnp.abs(wo_fast - wo_ref))) < 0.5

    print("KERNEL_OK")
</pallas_src>

<mosaic_0001>
module attributes {stable_mosaic.version = 11 : i64} {
  func.func @acnn_kernel(%arg0: i32, %arg1: memref<2x8x16xf32, #tpu.memory_space<vmem>>, %arg2: memref<2x2x16xf32, #tpu.memory_space<vmem>>, %arg3: memref<2x8x24xf32, #tpu.memory_space<vmem>>, %arg4: memref<24x24xf32, #tpu.memory_space<vmem>>, %arg5: memref<1x8xf32, #tpu.memory_space<vmem>>, %arg6: memref<8x4xf32, #tpu.memory_space<vmem>>, %arg7: memref<4x8xf32, #tpu.memory_space<vmem>>, %arg8: memref<2x8xf32, #tpu.memory_space<vmem>>, %arg9: memref<2x16x24xf32, #tpu.memory_space<vmem>>) attributes {dimension_semantics = [#tpu.dimension_semantics<parallel>], iteration_bounds = array<i64: 1>, scalar_prefetch = 0 : i64, scratch_operands = 1 : i64, tpu.core_type = #tpu.core_type<tc>, window_params = [{transform_indices = @transform_0, window_bounds = array<i64: 2, 8, 16>}, {transform_indices = @transform_1, window_bounds = array<i64: 2, 2, 16>}, {transform_indices = @transform_2, window_bounds = array<i64: 2, 8, 24>}, {pipeline_mode = #tpu.pipeline_mode<synchronous>, transform_indices = @transform_3, window_bounds = array<i64: 24, 24>}, {pipeline_mode = #tpu.pipeline_mode<synchronous>, transform_indices = @transform_4, window_bounds = array<i64: 1, 8>}, {pipeline_mode = #tpu.pipeline_mode<synchronous>, transform_indices = @transform_5, window_bounds = array<i64: 8, 4>}, {pipeline_mode = #tpu.pipeline_mode<synchronous>, transform_indices = @transform_6, window_bounds = array<i64: 4, 8>}, {transform_indices = @transform_7, window_bounds = array<i64: 2, 8>}]} {
    %c0 = arith.constant 0 : index
    %c0_0 = arith.constant 0 : index
    %c0_1 = arith.constant 0 : index
    %0 = vector.load %arg1[%c0, %c0_0, %c0_1] : memref<2x8x16xf32, #tpu.memory_space<vmem>>, vector<2x8x16xf32>
    %c0_2 = arith.constant 0 : index
    %c0_3 = arith.constant 0 : index
    %c0_4 = arith.constant 0 : index
    %1 = vector.load %arg2[%c0_2, %c0_3, %c0_4] : memref<2x2x16xf32, #tpu.memory_space<vmem>>, vector<2x2x16xf32>
    %c0_5 = arith.constant 0 : index
    %c0_6 = arith.constant 0 : index
    %c0_7 = arith.constant 0 : index
    %2 = vector.load %arg3[%c0_5, %c0_6, %c0_7] : memref<2x8x24xf32, #tpu.memory_space<vmem>>, vector<2x8x24xf32>
    "tpu.trace_start"() <{level = 10 : i32, message = "bnd,bed->bne"}> : () -> ()
    %cst = arith.constant dense<0.000000e+00> : vector<2x8x2xf32>
    %3 = tpu.matmul %0, %1, %cst {dimension_numbers = #tpu.dot_dimension_numbers<[2], [2], [1], [1], [0, 0, 0, 1, 1, 1], [0], [0]>} : vector<2x8x16xf32>, vector<2x2x16xf32>, vector<2x8x2xf32> -> vector<2x8x2xf32>
    "tpu.trace_stop"() : () -> ()
    %cst_8 = arith.constant dense<0xFF800000> : vector<2x2xf32>
    %4 = vector.multi_reduction <maximumf>, %3, %cst_8 [1] : vector<2x8x2xf32> to vector<2x2xf32>
    %5 = vector.shape_cast %4 : vector<2x2xf32> to vector<2x1x2xf32>
    %6 = vector.broadcast %5 : vector<2x1x2xf32> to vector<2x8x2xf32>
    %7 = arith.subf %3, %6 : vector<2x8x2xf32>
    %8 = math.exp %7 : vector<2x8x2xf32>
    %cst_9 = arith.constant dense<0.000000e+00> : vector<2x2xf32>
    %9 = vector.multi_reduction <add>, %8, %cst_9 [1] : vector<2x8x2xf32> to vector<2x2xf32>
    %10 = vector.shape_cast %9 : vector<2x2xf32> to vector<2x1x2xf32>
    %11 = tpu.reciprocal %10 : vector<2x1x2xf32> -> vector<2x1x2xf32>
    %12 = vector.broadcast %11 : vector<2x1x2xf32> to vector<2x8x2xf32>
    %13 = arith.mulf %8, %12 : vector<2x8x2xf32>
    %cst_10 = arith.constant dense<0.000000e+00> : vector<2x8xf32>
    %14 = vector.multi_reduction <add>, %13, %cst_10 [2] : vector<2x8x2xf32> to vector<2x8xf32>
    %15 = vector.shape_cast %14 : vector<2x8xf32> to vector<2x8x1xf32>
    %cst_11 = arith.constant 5.000000e-01 : f32
    %16 = vector.broadcast %cst_11 : f32 to vector<2x8x1xf32>
    %17 = arith.mulf %16, %15 : vector<2x8x1xf32>
    %18 = vector.broadcast %17 : vector<2x8x1xf32> to vector<2x8x24xf32>
    %19 = arith.mulf %2, %18 : vector<2x8x24xf32>
    %c0_12 = arith.constant 0 : index
    %c1 = arith.constant 1 : index
    %c0_13 = arith.constant 0 : index
    %20 = vector.load %arg9[%c0_12, %c1, %c0_13] : memref<2x16x24xf32, #tpu.memory_space<vmem>>, vector<2x8x24xf32>
    tpu.vector_store %arg9[%c0_12, %c1, %c0_13], %19 {strides = array<i32>} : memref<2x16x24xf32, #tpu.memory_space<vmem>>, vector<2x8x24xf32>,
    %c0_14 = arith.constant 0 : index
    %c0_15 = arith.constant 0 : index
    %c0_16 = arith.constant 0 : index
    %21 = vector.load %arg9[%c0_14, %c0_15, %c0_16] : memref<2x16x24xf32, #tpu.memory_space<vmem>>, vector<2x16x24xf32>
    %22 = vector.shape_cast %21 : vector<2x16x24xf32> to vector<32x24xf32>
    %c0_17 = arith.constant 0 : index
    %c0_18 = arith.constant 0 : index
    %23 = vector.load %arg4[%c0_17, %c0_18] : memref<24x24xf32, #tpu.memory_space<vmem>>, vector<24x24xf32>
    %cst_19 = arith.constant dense<0.000000e+00> : vector<32x24xf32>
    %24 = tpu.matmul %22, %23, %cst_19 {dimension_numbers = #tpu.dot_dimension_numbers<[1], [0], [0], [1], [0, 0, 1, 1], [], []>} : vector<32x24xf32>, vector<24x24xf32>, vector<32x24xf32> -> vector<32x24xf32>
    %25 = vector.shape_cast %24 : vector<32x24xf32> to vector<2x16x24xf32>
    %26 = tpu.iota {dimensions = array<i32: 1>} : vector<2x8x8xi32>
    %c0_20 = arith.constant 0 : index
    %c0_21 = arith.constant 0 : index
    %27 = vector.load %arg5[%c0_20, %c0_21] : memref<1x8xf32, #tpu.memory_space<vmem>>, vector<1x8xf32>
    %28 = vector.shape_cast %27 : vector<1x8xf32> to vector<1x1x8xf32>
    %29 = vector.broadcast %28 : vector<1x1x8xf32> to vector<2x8x8xf32>
    %30 = vector.extract_strided_slice %25 {offsets = [0, 0, 0], sizes = [2, 8, 8], strides = [1, 1, 1]} : vector<2x16x24xf32> to vector<2x8x8xf32>
    %c1_i32 = arith.constant 1 : i32
    %31 = vector.broadcast %c1_i32 : i32 to vector<2x8x8xi32>
    %32 = arith.cmpi sge, %26, %31 : vector<2x8x8xi32>
    %c9_i32 = arith.constant 9 : i32
    %33 = vector.broadcast %c9_i32 : i32 to vector<2x8x8xi32>
    %34 = arith.cmpi slt, %26, %33 : vector<2x8x8xi32>
    %35 = arith.andi %32, %34 : vector<2x8x8xi1>
    %cst_22 = arith.constant 0.000000e+00 : f32
    %36 = vector.broadcast %cst_22 : f32 to vector<2x8x8xf32>
    %37 = arith.select %35, %30, %36 : vector<2x8x8xi1>, vector<2x8x8xf32>
    %38 = arith.addf %29, %37 : vector<2x8x8xf32>
    %39 = vector.extract_strided_slice %25 {offsets = [0, 1, 8], sizes = [2, 8, 8], strides = [1, 1, 1]} : vector<2x16x24xf32> to vector<2x8x8xf32>
    %40 = arith.addf %38, %39 : vector<2x8x8xf32>
    %41 = vector.extract_strided_slice %25 {offsets = [0, 2, 16], sizes = [2, 8, 8], strides = [1, 1, 1]} : vector<2x16x24xf32> to vector<2x8x8xf32>
    %c-1_i32 = arith.constant -1 : i32
    %42 = vector.broadcast %c-1_i32 : i32 to vector<2x8x8xi32>
    %43 = arith.cmpi sge, %26, %42 : vector<2x8x8xi32>
    %c7_i32 = arith.constant 7 : i32
    %44 = vector.broadcast %c7_i32 : i32 to vector<2x8x8xi32>
    %45 = arith.cmpi slt, %26, %44 : vector<2x8x8xi32>
    %46 = arith.andi %43, %45 : vector<2x8x8xi1>
    %cst_23 = arith.constant 0.000000e+00 : f32
    %47 = vector.broadcast %cst_23 : f32 to vector<2x8x8xf32>
    %48 = arith.select %46, %41, %47 : vector<2x8x8xi1>, vector<2x8x8xf32>
    %49 = arith.addf %40, %48 : vector<2x8x8xf32>
    %50 = math.tanh %49 : vector<2x8x8xf32>
    %51 = vector.shape_cast %50 : vector<2x8x8xf32> to vector<16x8xf32>
    %c0_24 = arith.constant 0 : index
    %c0_25 = arith.constant 0 : index
    %52 = vector.load %arg6[%c0_24, %c0_25] : memref<8x4xf32, #tpu.memory_space<vmem>>, vector<8x4xf32>
    %cst_26 = arith.constant dense<0.000000e+00> : vector<16x4xf32>
    %53 = tpu.matmul %51, %52, %cst_26 {dimension_numbers = #tpu.dot_dimension_numbers<[1], [0], [0], [1], [0, 0, 1, 1], [], []>} : vector<16x8xf32>, vector<8x4xf32>, vector<16x4xf32> -> vector<16x4xf32>
    %c0_27 = arith.constant 0 : index
    %c0_28 = arith.constant 0 : index
    %54 = vector.load %arg7[%c0_27, %c0_28] : memref<4x8xf32, #tpu.memory_space<vmem>>, vector<4x8xf32>
    %cst_29 = arith.constant dense<0.000000e+00> : vector<16x8xf32>
    %55 = tpu.matmul %53, %54, %cst_29 {dimension_numbers = #tpu.dot_dimension_numbers<[1], [0], [0], [1], [0, 0, 1, 1], [], []>} : vector<16x4xf32>, vector<4x8xf32>, vector<16x8xf32> -> vector<16x8xf32>
    %56 = vector.shape_cast %55 : vector<16x8xf32> to vector<2x8x8xf32>
    %cst_30 = arith.constant dense<0xFF800000> : vector<2x8xf32>
    %57 = vector.multi_reduction <maximumf>, %56, %cst_30 [1] : vector<2x8x8xf32> to vector<2x8xf32>
    %58 = vector.shape_cast %57 : vector<2x8xf32> to vector<2x1x8xf32>
    %59 = vector.broadcast %58 : vector<2x1x8xf32> to vector<2x8x8xf32>
    %60 = arith.subf %56, %59 : vector<2x8x8xf32>
    %61 = math.exp %60 : vector<2x8x8xf32>
    %cst_31 = arith.constant dense<0.000000e+00> : vector<2x8xf32>
    %62 = vector.multi_reduction <add>, %61, %cst_31 [1] : vector<2x8x8xf32> to vector<2x8xf32>
    %63 = vector.shape_cast %62 : vector<2x8xf32> to vector<2x1x8xf32>
    %64 = tpu.reciprocal %63 : vector<2x1x8xf32> -> vector<2x1x8xf32>
    %65 = vector.broadcast %64 : vector<2x1x8xf32> to vector<2x8x8xf32>
    %66 = arith.mulf %61, %65 : vector<2x8x8xf32>
    %67 = arith.mulf %50, %66 : vector<2x8x8xf32>
    %cst_32 = arith.constant dense<0xFF800000> : vector<2x8xf32>
    %68 = vector.multi_reduction <maximumf>, %67, %cst_32 [1] : vector<2x8x8xf32> to vector<2x8xf32>
    %c0_33 = arith.constant 0 : index
    %c0_34 = arith.constant 0 : index
    %69 = vector.load %arg8[%c0_33, %c0_34] : memref<2x8xf32, #tpu.memory_space<vmem>>, vector<2x8xf32>
    tpu.vector_store %arg8[%c0_33, %c0_34], %68 {strides = array<i32>} : memref<2x8xf32, #tpu.memory_space<vmem>>, vector<2x8xf32>,
    return
  }
  func.func @transform_0(%arg0: i32) -> (i32, i32, i32) {
    %c0_i32 = arith.constant 0 : i32
    %c0_i32_0 = arith.constant 0 : i32
    %c0_i32_1 = arith.constant 0 : i32
    return %arg0, %c0_i32, %c0_i32_0 : i32, i32, i32
  }
  func.func @transform_1(%arg0: i32) -> (i32, i32, i32) {
    %c0_i32 = arith.constant 0 : i32
    %c0_i32_0 = arith.constant 0 : i32
    %c0_i32_1 = arith.constant 0 : i32
    return %arg0, %c0_i32, %c0_i32_0 : i32, i32, i32
  }
  func.func @transform_2(%arg0: i32) -> (i32, i32, i32) {
    %c0_i32 = arith.constant 0 : i32
    %c0_i32_0 = arith.constant 0 : i32
    %c0_i32_1 = arith.constant 0 : i32
    return %arg0, %c0_i32, %c0_i32_0 : i32, i32, i32
  }
  func.func @transform_3(%arg0: i32) -> (i32, i32) {
    %c0_i32 = arith.constant 0 : i32
    %c0_i32_0 = arith.constant 0 : i32
    %c0_i32_1 = arith.constant 0 : i32
    return %c0_i32, %c0_i32_0 : i32, i32
  }
  func.func @transform_4(%arg0: i32) -> (i32, i32) {
    %c0_i32 = arith.constant 0 : i32
    %c0_i32_0 = arith.constant 0 : i32
    %c0_i32_1 = arith.constant 0 : i32
    return %c0_i32, %c0_i32_0 : i32, i32
  }
  func.func @transform_5(%arg0: i32) -> (i32, i32) {
    %c0_i32 = arith.constant 0 : i32
    %c0_i32_0 = arith.constant 0 : i32
    %c0_i32_1 = arith.constant 0 : i32
    return %c0_i32, %c0_i32_0 : i32, i32
  }
  func.func @transform_6(%arg0: i32) -> (i32, i32) {
    %c0_i32 = arith.constant 0 : i32
    %c0_i32_0 = arith.constant 0 : i32
    %c0_i32_1 = arith.constant 0 : i32
    return %c0_i32, %c0_i32_0 : i32, i32
  }
  func.func @transform_7(%arg0: i32) -> (i32, i32) {
    %c0_i32 = arith.constant 0 : i32
    %c0_i32_0 = arith.constant 0 : i32
    return %arg0, %c0_i32 : i32, i32
  }
}

</mosaic_0001>

<llo_original>
// kernel: tpu_custom_call.1
$region0: #{tpu_custom_call.1}
  #allocation0 [shape = 'u32[]', space=smem, size = 0x4, offset = 0x4, fixed_abs, tag = 'smem constant byte address 0x4 - core index']
  #allocation1 [shape = 'u32[144,128]{1,0:T(1,128)}', space=vmem, size = 0x12000, scoped, tag = 'internal scratch']
  #allocation2 [shape = 'f32[2,16,24]{2,1,0:T(8,128)}', space=vmem, size = 0x4000, scoped, tag = 'scratch operand']
  %s0 = inlined_call_operand.hbm [shape: f32[2,8,16], index: 0, kind: input, shape index: {}]
  %s1 = inlined_call_operand.vmem [shape: f32[2,2,16], index: 1, kind: input, shape index: {}]
  %s2 = inlined_call_operand.hbm [shape: f32[2,8,24], index: 2, kind: input, shape index: {}]
  %s3 = inlined_call_operand.hbm [shape: f32[24,24], index: 3, kind: input, shape index: {}]
  %s4 = inlined_call_operand.vmem [shape: f32[1,8], index: 4, kind: input, shape index: {}]
  %s5 = inlined_call_operand.vmem [shape: f32[8,4], index: 5, kind: input, shape index: {}]
  %s6 = inlined_call_operand.vmem [shape: f32[4,8], index: 6, kind: input, shape index: {}]
  %s7 = inlined_call_operand.hbm [shape: f32[2,8], index: 7, kind: output, shape index: {}]
  %s8 = sld [smem:[#allocation0]]
  $region50: #{tpu_custom_call.1} parent=0
    _
  %s10 = ssub.s32 1, %s8
  %s11 = scalar_select 0, %s10, %s8
  $region1: #{tpu_custom_call.1} parent=0
    #allocation3 [shape = 'u8[8192]{0}', space=vmem, size = 0x2000, scoped, tag = 'input window, operand 0, single buffered']
    #allocation4 [shape = 's32[1]{0}', space=sflag, size = 0x4, scoped, tag = 'scoped memory for tpu_custom_call.1']
    #allocation5 [shape = 's32[1]{0}', space=sflag, size = 0x4, scoped, tag = 'scoped memory for tpu_custom_call.1']
    #allocation6 [shape = 'u8[8192]{0}', space=vmem, size = 0x2000, scoped, tag = 'input window, operand 2, single buffered']
    #allocation7 [shape = 's32[1]{0}', space=sflag, size = 0x4, scoped, tag = 'scoped memory for tpu_custom_call.1']
    #allocation8 [shape = 'u8[12288]{0}', space=vmem, size = 0x3000, scoped, tag = 'input window, operand 3, single buffered']
    #allocation9 [shape = 'u8[1024]{0}', space=vmem, size = 0x400, scoped, tag = 'output window, operand 0, single buffered']
    %12 = vsyncpa [#allocation4], 0
    %13 = vsyncpa [#allocation7], 0
    %14 = vsyncpa [#allocation5], 0
    // Predicated region
    $region2: #{tpu_custom_call.1} parent=1 // pred_check
      _
    $region3: #{tpu_custom_call.1} parent=1 // pred_check_branch
      %16 = sbr.rel (0) target = $region5
    $region4: #{tpu_custom_call.1} parent=1 // pred_region
      %s18 = ssub.s32 256, 256
      %19 = vsyncadd [#allocation4], %s18
      %s20 = sshll.u32 [#allocation3], 4
      %s21 = int_to_ptr.vmem [resolvable:$true] %s20
      %26 = dma.hbm_to_vmem [thread:$0]  %s0, 256, %s21, [#allocation4], 128, 128, 8
    $region5: #{tpu_custom_call.1} parent=1 // pred_fallthru
      _
    // Predicated region
    $region6: #{tpu_custom_call.1} parent=1 // pred_check
      _
    $region7: #{tpu_custom_call.1} parent=1 // pred_check_branch
      %28 = sbr.rel (0) target = $region9
    $region8: #{tpu_custom_call.1} parent=1 // pred_region
      _
    $region9: #{tpu_custom_call.1} parent=1 // pred_fallthru
      _
    // Predicated region
    $region10: #{tpu_custom_call.1} parent=1 // pred_check
      _
    $region11: #{tpu_custom_call.1} parent=1 // pred_check_branch
      %30 = sbr.rel (0) target = $region13
    $region12: #{tpu_custom_call.1} parent=1 // pred_region
      %s32 = ssub.s32 256, 256
      %33 = vsyncadd [#allocation7], %s32
      %s34 = sshll.u32 [#allocation6], 4
      %s35 = int_to_ptr.vmem [resolvable:$true] %s34
      %40 = dma.hbm_to_vmem [thread:$0]  %s2, 256, %s35, [#allocation7], 128, 128, 8
    $region13: #{tpu_custom_call.1} parent=1 // pred_fallthru
      _
    // Predicated region
    $region14: #{tpu_custom_call.1} parent=1 // pred_check
      _
    $region15: #{tpu_custom_call.1} parent=1 // pred_check_branch
      %42 = sbr.rel (0) target = $region17
    $region16: #{tpu_custom_call.1} parent=1 // pred_region
      %s44 = ssub.s32 384, 384
      %45 = vsyncadd [#allocation7], %s44
      %s46 = sshll.u32 [#allocation8], 4
      %s47 = int_to_ptr.vmem [resolvable:$true] %s46
      %52 = dma.hbm_to_vmem [thread:$0]  %s3, 384, %s47, [#allocation7], 128, 128, 8
    $region17: #{tpu_custom_call.1} parent=1 // pred_fallthru
      _
    // Predicated region
    $region18: #{tpu_custom_call.1} parent=1 // pred_check
      _
    $region19: #{tpu_custom_call.1} parent=1 // pred_check_branch
      %54 = sbr.rel (0) target = $region21
    $region20: #{tpu_custom_call.1} parent=1 // pred_region
      _
    $region21: #{tpu_custom_call.1} parent=1 // pred_fallthru
      _
    // Predicated region
    $region22: #{tpu_custom_call.1} parent=1 // pred_check
      _
    $region23: #{tpu_custom_call.1} parent=1 // pred_check_branch
      %56 = sbr.rel (0) target = $region25
    $region24: #{tpu_custom_call.1} parent=1 // pred_region
      _
    $region25: #{tpu_custom_call.1} parent=1 // pred_fallthru
      _
    // Predicated region
    $region26: #{tpu_custom_call.1} parent=1 // pred_check
      _
    $region27: #{tpu_custom_call.1} parent=1 // pred_check_branch
      %58 = sbr.rel (0) target = $region29
    $region28: #{tpu_custom_call.1} parent=1 // pred_region
      _
    $region29: #{tpu_custom_call.1} parent=1 // pred_fallthru
      _
    // Predicated region
    $region30: #{tpu_custom_call.1} parent=1 // pred_check
      _
    $region31: #{tpu_custom_call.1} parent=1 // pred_check_branch
      %60 = sbr.rel (0) target = $region33
    $region32: #{tpu_custom_call.1} parent=1 // pred_region
      %61 = dma.done [#allocation4], 256
    $region33: #{tpu_custom_call.1} parent=1 // pred_fallthru
      _
    // Predicated region
    $region34: #{tpu_custom_call.1} parent=1 // pred_check
      _
    $region35: #{tpu_custom_call.1} parent=1 // pred_check_branch
      %63 = sbr.rel (0) target = $region37
    $region36: #{tpu_custom_call.1} parent=1 // pred_region
      %64 = dma.done [#allocation7], 256
    $region37: #{tpu_custom_call.1} parent=1 // pred_fallthru
      _
    // Predicated region
    $region38: #{tpu_custom_call.1} parent=1 // pred_check
      _
    $region39: #{tpu_custom_call.1} parent=1 // pred_check_branch
      %66 = sbr.rel (0) target = $region41
    $region40: #{tpu_custom_call.1} parent=1 // pred_region
      %67 = dma.done [#allocation7], 384
    $region41: #{tpu_custom_call.1} parent=1 // pred_fallthru
      _
    %v68 = vld [vmem:[#allocation3] sm:$0xff]
    %v69 = vld [vmem:[#allocation3 + $0x8] sm:$0xff]
    %v70 = vld [vmem:[%s1] sm:$0x3]
    %v71 = vld [vmem:[%s1 + $0x2] sm:$0x3]
    %v72 = vld [vmem:[#allocation6] sm:$0xff]
    %v73 = vld [vmem:[#allocation6 + $0x8] sm:$0xff]
    %vm74 = vcmask 130048
    %v76 = vsel %vm74, %v68, 0
    %v79 = vsel %vm74, %v70, 0
    %81 = vmatprep.subr.mxu0 0.0
    %82 = vmatpush1.xpose.msra.mxu0 0.0
    %83 = vmatprep.subr.mxu0 0.0
    %84 = vmatpush1.xpose.msra.mxu0 0.0
    %85 = vmatprep.subr.mxu0 0.0
    %86 = vmatpush1.xpose.msra.mxu0 0.0
    %87 = vmatprep.subr.mxu0 0.0
    %88 = vmatpush1.xpose.msra.mxu0 0.0
    %89 = vmatprep.subr.mxu0 0.0
    %90 = vmatpush1.xpose.msra.mxu0 0.0
    %91 = vmatprep.subr.mxu0 0.0
    %92 = vmatpush1.xpose.msra.mxu0 0.0
    %93 = vmatprep.subr.mxu0 0.0
    %94 = vmatpush1.xpose.msra.mxu0 0.0
    %95 = vmatprep.subr.mxu0 0.0
    %96 = vmatpush1.xpose.msra.mxu0 0.0
    %97 = vmatprep.subr.mxu0 0.0
    %98 = vmatpush1.xpose.msra.mxu0 0.0
    %99 = vmatprep.subr.mxu0 0.0
    %100 = vmatpush1.xpose.msra.mxu0 0.0
    %101 = vmatprep.subr.mxu0 0.0
    %102 = vmatpush1.xpose.msra.mxu0 0.0
    %103 = vmatprep.subr.mxu0 0.0
    %104 = vmatpush1.xpose.msra.mxu0 0.0
    %105 = vmatprep.subr.mxu0 0.0
    %106 = vmatpush1.xpose.msra.mxu0 0.0
    %107 = vmatprep.subr.mxu0 0.0
    %108 = vmatpush1.xpose.msra.mxu0 0.0
    %109 = vmatprep.subr.mxu0 0.0
    %110 = vmatpush1.xpose.msra.mxu0 0.0
    %111 = vmatprep.subr.mxu0 0.0
    %112 = vmatpush1.xpose.msra.mxu0 %v79
    %113 = vmatprep.subr.mxu0 0.0
    %114 = vmatpush2.xpose.msra.mxu0 0.0
    %115 = vmatprep.subr.mxu0 0.0
    %116 = vmatpush2.xpose.msra.mxu0 0.0
    %117 = vmatprep.subr.mxu0 0.0
    %118 = vmatpush2.xpose.msra.mxu0 0.0
    %119 = vmatprep.subr.mxu0 0.0
    %120 = vmatpush2.xpose.msra.mxu0 0.0
    %121 = vmatprep.subr.mxu0 0.0
    %122 = vmatpush2.xpose.msra.mxu0 0.0
    %123 = vmatprep.subr.mxu0 0.0
    %124 = vmatpush2.xpose.msra.mxu0 0.0
    %125 = vmatprep.subr.mxu0 0.0
    %126 = vmatpush2.xpose.msra.mxu0 0.0
    %127 = vmatprep.subr.mxu0 0.0
    %128 = vmatpush2.xpose.msra.mxu0 0.0
    %129 = vmatprep.subr.mxu0 0.0
    %130 = vmatpush2.xpose.msra.mxu0 0.0
    %131 = vmatprep.subr.mxu0 0.0
    %132 = vmatpush2.xpose.msra.mxu0 0.0
    %133 = vmatprep.subr.mxu0 0.0
    %134 = vmatpush2.xpose.msra.mxu0 0.0
    %135 = vmatprep.subr.mxu0 0.0
    %136 = vmatpush2.xpose.msra.mxu0 0.0
    %137 = vmatprep.subr.mxu0 0.0
    %138 = vmatpush2.xpose.msra.mxu0 0.0
    %139 = vmatprep.subr.mxu0 0.0
    %140 = vmatpush2.xpose.msra.mxu0 0.0
    %141 = vmatprep.subr.mxu0 0.0
    %142 = vmatpush2.xpose.msra.mxu0 0.0
    %143 = vmatprep.subr.mxu0 0.0
    %144 = vmatpush2.xpose.msra.mxu0 0.0
    %145 = vmatprep.mubr.f32.mxu0 0.0
    %146 = vmatmul.mubr.f32.gmra.mxu0 %v76
    %v147 = vpop.f32.mrf.mxu0
    %v148 = vadd.f32 0.0, %v147
    %v149 = vpop.f32.mrf.mxu0
    %150 = vdwg.mxu0
    %v152 = vsel %vm74, %v69, 0
    %v155 = vsel %vm74, %v71, 0
    %157 = vmatprep.subr.mxu0 0.0
    %158 = vmatpush1.xpose.msra.mxu0 0.0
    %159 = vmatprep.subr.mxu0 0.0
    %160 = vmatpush1.xpose.msra.mxu0 0.0
    %161 = vmatprep.subr.mxu0 0.0
    %162 = vmatpush1.xpose.msra.mxu0 0.0
    %163 = vmatprep.subr.mxu0 0.0
    %164 = vmatpush1.xpose.msra.mxu0 0.0
    %165 = vmatprep.subr.mxu0 0.0
    %166 = vmatpush1.xpose.msra.mxu0 0.0
    %167 = vmatprep.subr.mxu0 0.0
    %168 = vmatpush1.xpose.msra.mxu0 0.0
    %169 = vmatprep.subr.mxu0 0.0
    %170 = vmatpush1.xpose.msra.mxu0 0.0
    %171 = vmatprep.subr.mxu0 0.0
    %172 = vmatpush1.xpose.msra.mxu0 0.0
    %173 = vmatprep.subr.mxu0 0.0
    %174 = vmatpush1.xpose.msra.mxu0 0.0
    %175 = vmatprep.subr.mxu0 0.0
    %176 = vmatpush1.xpose.msra.mxu0 0.0
    %177 = vmatprep.subr.mxu0 0.0
    %178 = vmatpush1.xpose.msra.mxu0 0.0
    %179 = vmatprep.subr.mxu0 0.0
    %180 = vmatpush1.xpose.msra.mxu0 0.0
    %181 = vmatprep.subr.mxu0 0.0
    %182 = vmatpush1.xpose.msra.mxu0 0.0
    %183 = vmatprep.subr.mxu0 0.0
    %184 = vmatpush1.xpose.msra.mxu0 0.0
    %185 = vmatprep.subr.mxu0 0.0
    %186 = vmatpush1.xpose.msra.mxu0 0.0
    %187 = vmatprep.subr.mxu0 0.0
    %188 = vmatpush1.xpose.msra.mxu0 %v155
    %189 = vmatprep.subr.mxu0 0.0
    %190 = vmatpush2.xpose.msra.mxu0 0.0
    %191 = vmatprep.subr.mxu0 0.0
    %192 = vmatpush2.xpose.msra.mxu0 0.0
    %193 = vmatprep.subr.mxu0 0.0
    %194 = vmatpush2.xpose.msra.mxu0 0.0
    %195 = vmatprep.subr.mxu0 0.0
    %196 = vmatpush2.xpose.msra.mxu0 0.0
    %197 = vmatprep.subr.mxu0 0.0
    %198 = vmatpush2.xpose.msra.mxu0 0.0
    %199 = vmatprep.subr.mxu0 0.0
    %200 = vmatpush2.xpose.msra.mxu0 0.0
    %201 = vmatprep.subr.mxu0 0.0
    %202 = vmatpush2.xpose.msra.mxu0 0.0
    %203 = vmatprep.subr.mxu0 0.0
    %204 = vmatpush2.xpose.msra.mxu0 0.0
    %205 = vmatprep.subr.mxu0 0.0
    %206 = vmatpush2.xpose.msra.mxu0 0.0
    %207 = vmatprep.subr.mxu0 0.0
    %208 = vmatpush2.xpose.msra.mxu0 0.0
    %209 = vmatprep.subr.mxu0 0.0
    %210 = vmatpush2.xpose.msra.mxu0 0.0
    %211 = vmatprep.subr.mxu0 0.0
    %212 = vmatpush2.xpose.msra.mxu0 0.0
    %213 = vmatprep.subr.mxu0 0.0
    %214 = vmatpush2.xpose.msra.mxu0 0.0
    %215 = vmatprep.subr.mxu0 0.0
    %216 = vmatpush2.xpose.msra.mxu0 0.0
    %217 = vmatprep.subr.mxu0 0.0
    %218 = vmatpush2.xpose.msra.mxu0 0.0
    %219 = vmatprep.subr.mxu0 0.0
    %220 = vmatpush2.xpose.msra.mxu0 0.0
    %221 = vmatprep.mubr.f32.mxu0 0.0
    %222 = vmatmul.mubr.f32.gmra.mxu0 %v152
    %v223 = vpop.f32.mrf.mxu0
    %v224 = vadd.f32 0.0, %v223
    %v225 = vpop.f32.mrf.mxu0
    %226 = vdwg.mxu0
    %vm227 = vcmask 15360
    %v228 = vsel %vm227, %v148, -inf
    %v229 = vrot.slane %v228, 4
    %v230 = vmax.f32 %v228, %v229
    %v231 = vrot.slane %v230, 2
    %v232 = vmax.f32 %v230, %v231
    %v233 = vrot.slane %v232, 1
    %v234 = vmax.f32 %v232, %v233
    %v235 = vsel %vm227, %v224, -inf
    %v236 = vrot.slane %v235, 4
    %v237 = vmax.f32 %v235, %v236
    %v238 = vrot.slane %v237, 2
    %v239 = vmax.f32 %v237, %v238
    %v240 = vrot.slane %v239, 1
    %v241 = vmax.f32 %v239, %v240
    %v242 = vsub.f32 %v148, %v234
    %v243 = vsub.f32 %v224, %v241
    %v244 = vmul.f32 %v242, 1.442695
    %v245 = vpow.pop %v244
    %v246 = vmul.f32 %v243, 1.442695
    %v247 = vpow.pop %v246
    %v248 = vsel %vm227, %v245, 0.0
    %v249 = vrot.slane %v248, 4
    %v250 = vadd.f32 %v248, %v249
    %v251 = vrot.slane %v250, 2
    %v252 = vadd.f32 %v250, %v251
    %v253 = vrot.slane %v252, 1
    %v254 = vadd.f32 %v252, %v253
    %v255 = vsel %vm227, %v247, 0.0
    %v256 = vrot.slane %v255, 4
    %v257 = vadd.f32 %v255, %v256
    %v258 = vrot.slane %v257, 2
    %v259 = vadd.f32 %v257, %v258
    %v260 = vrot.slane %v259, 1
    %v261 = vadd.f32 %v259, %v260
    %v262 = vrcp.pop %v254
    %v263 = vrcp.pop %v261
    %v264 = vmul.f32 %v245, %v262
    %v265 = vmul.f32 %v247, %v263
    %v266 = vsel %vm227, %v264, 0.0
    %267 = vadd.xlane.f32.xlu0 %v266
    %v268 = vpop.xlane.xlu0 %267
    %v269 = vsel %vm227, %v265, 0.0
    %270 = vadd.xlane.f32.xlu0 %v269
    %v271 = vpop.xlane.xlu0 %270
    %v272 = vmul.f32 %v268, 0.5
    %v273 = vmul.f32 %v271, 0.5
    %v274 = vmul.f32 %v72, %v272
    %v275 = vmul.f32 %v73, %v273
    %vm276 = vcmask 195584
    %277 = vst.msk [vmem:[#allocation2 + $0x1] sm:$0xff] %vm276, %v274
    %278 = vst.msk [vmem:[#allocation2 + $0x11] sm:$0xff] %vm276, %v275
    %v279 = vld [vmem:[#allocation2] sm:$0xff]
    %v280 = vld [vmem:[#allocation2 + $0x8] sm:$0xff]
    %v281 = vld [vmem:[#allocation2 + $0x10] sm:$0xff]
    %v282 = vld [vmem:[#allocation2 + $0x18] sm:$0xff]
    %v283 = vld [vmem:[#allocation8] sm:$0xff]
    %v284 = vld [vmem:[#allocation8 + $0x8] sm:$0xff]
    %v285 = vld [vmem:[#allocation8 + $0x10] sm:$0xff]
    %v287 = vsel %vm276, %v279, 0
    %v290 = vsel %vm276, %v280, 0
    %v293 = vsel %vm276, %v281, 0
    %v296 = vsel %vm276, %v282, 0
    %298 = vmatprep.subr.mxu0 0.0
    %299 = vmatpush1.msra.mxu0 0.0
    %300 = vmatprep.subr.mxu0 0.0
    %301 = vmatpush1.msra.mxu0 0.0
    %302 = vmatprep.subr.mxu0 0.0
    %303 = vmatpush1.msra.mxu0 0.0
    %304 = vmatprep.subr.mxu0 0.0
    %305 = vmatpush1.msra.mxu0 0.0
    %306 = vmatprep.subr.mxu0 0.0
    %307 = vmatpush1.msra.mxu0 0.0
    %308 = vmatprep.subr.mxu0 0.0
    %309 = vmatpush1.msra.mxu0 0.0
    %310 = vmatprep.subr.mxu0 0.0
    %311 = vmatpush1.msra.mxu0 0.0
    %312 = vmatprep.subr.mxu0 0.0
    %313 = vmatpush1.msra.mxu0 0.0
    %314 = vmatprep.subr.mxu0 0.0
    %315 = vmatpush1.msra.mxu0 0.0
    %316 = vmatprep.subr.mxu0 0.0
    %317 = vmatpush1.msra.mxu0 0.0
    %318 = vmatprep.subr.mxu0 0.0
    %319 = vmatpush1.msra.mxu0 0.0
    %320 = vmatprep.subr.mxu0 0.0
    %321 = vmatpush1.msra.mxu0 0.0
    %322 = vmatprep.subr.mxu0 0.0
    %323 = vmatpush1.msra.mxu0 0.0
    %324 = vmatprep.subr.mxu0 0.0
    %325 = vmatpush1.msra.mxu0 %v285
    %326 = vmatprep.subr.mxu0 0.0
    %327 = vmatpush1.msra.mxu0 %v284
    %328 = vmatprep.subr.mxu0 0.0
    %329 = vmatpush1.msra.mxu0 %v283
    %330 = vmatprep.subr.mxu0 0.0
    %331 = vmatpush2.msra.mxu0 0.0
    %332 = vmatprep.subr.mxu0 0.0
    %333 = vmatpush2.msra.mxu0 0.0
    %334 = vmatprep.subr.mxu0 0.0
    %335 = vmatpush2.msra.mxu0 0.0
    %336 = vmatprep.subr.mxu0 0.0
    %337 = vmatpush2.msra.mxu0 0.0
    %338 = vmatprep.subr.mxu0 0.0
    %339 = vmatpush2.msra.mxu0 0.0
    %340 = vmatprep.subr.mxu0 0.0
    %341 = vmatpush2.msra.mxu0 0.0
    %342 = vmatprep.subr.mxu0 0.0
    %343 = vmatpush2.msra.mxu0 0.0
    %344 = vmatprep.subr.mxu0 0.0
    %345 = vmatpush2.msra.mxu0 0.0
    %346 = vmatprep.subr.mxu0 0.0
    %347 = vmatpush2.msra.mxu0 0.0
    %348 = vmatprep.subr.mxu0 0.0
    %349 = vmatpush2.msra.mxu0 0.0
    %350 = vmatprep.subr.mxu0 0.0
    %351 = vmatpush2.msra.mxu0 0.0
    %352 = vmatprep.subr.mxu0 0.0
    %353 = vmatpush2.msra.mxu0 0.0
    %354 = vmatprep.subr.mxu0 0.0
    %355 = vmatpush2.msra.mxu0 0.0
    %356 = vmatprep.subr.mxu0 0.0
    %357 = vmatpush2.msra.mxu0 0.0
    %358 = vmatprep.subr.mxu0 0.0
    %359 = vmatpush2.msra.mxu0 0.0
    %360 = vmatprep.subr.mxu0 0.0
    %361 = vmatpush2.msra.mxu0 0.0
    %362 = vmatprep.mubr.f32.mxu0 0.0
    %363 = vmatmul.mubr.f32.gmra.mxu0 %v287
    %v364 = vpop.f32.mrf.mxu0
    %v365 = vadd.f32 0.0, %v364
    %v366 = vpop.f32.mrf.mxu0
    %367 = vmatprep.mubr.f32.mxu0 0.0
    %368 = vmatmul.mubr.f32.gmra.mxu0 %v290
    %v369 = vpop.f32.mrf.mxu0
    %v370 = vadd.f32 0.0, %v369
    %v371 = vpop.f32.mrf.mxu0
    %372 = vmatprep.mubr.f32.mxu0 0.0
    %373 = vmatmul.mubr.f32.gmra.mxu0 %v293
    %v374 = vpop.f32.mrf.mxu0
    %v375 = vadd.f32 0.0, %v374
    %v376 = vpop.f32.mrf.mxu0
    %377 = vmatprep.mubr.f32.mxu0 0.0
    %378 = vmatmul.mubr.f32.gmra.mxu0 %v296
    %v379 = vpop.f32.mrf.mxu0
    %v380 = vadd.f32 0.0, %v379
    %v381 = vpop.f32.mrf.mxu0
    %382 = vdwg.mxu0
    %v383 = vlaneseq
    %v384 = vshrl.u32 %v383, 7
    %v385 = vld [vmem:[%s4] sm:$0x1]
    %v387 = vlaneseq
    %v388 = vshrl.u32 %v387, 7
    %v389 = vsub.s32 0, %v388
    %v390 = vrot.slane %v385, %v389
    %vm392 = vcmp.ge.s32.totalorder %v384, 1
    %vm393 = vcmp.lt.s32.totalorder %v384, 9
    %vm394 = vmand %vm392, %vm393
    %v395 = vsel %vm394, %v365, 0.0
    %v396 = vsel %vm394, %v375, 0.0
    %v397 = vadd.f32 %v390, %v395
    %v398 = vadd.f32 %v390, %v396
    %vm403 = vcmask 1046528
    %v404 = vrot.slane %v365, 1
    %v405 = vrot.slane %v370, 1
    %v406 = vsel %vm403, %v404, %v405
    %v407 = vrot.slane %v375, 1
    %v408 = vrot.slane %v380, 1
    %v409 = vsel %vm403, %v407, %v408
    %410 = vrot.lane.b32.xlu0 %v406, 120
    %v411 = vpop.permute.xlu0 %410
    %412 = vrot.lane.b32.xlu0 %v409, 120
    %v413 = vpop.permute.xlu0 %412
    %v416 = vadd.f32 %v397, %v411
    %v417 = vadd.f32 %v398, %v413
    %vm418 = vcmp.ge.s32.totalorder %v384, 4294967295
    %vm419 = vcmp.lt.s32.totalorder %v384, 7
    %vm420 = vmand %vm418, %vm419
    %vm421 = vcmask 1045504
    %v422 = vrot.slane %v365, 2
    %v423 = vrot.slane %v370, 2
    %v424 = vsel %vm421, %v422, %v423
    %v425 = vrot.slane %v375, 2
    %v426 = vrot.slane %v380, 2
    %v427 = vsel %vm421, %v425, %v426
    %428 = vrot.lane.b32.xlu0 %v424, 112
    %v429 = vpop.permute.xlu0 %428
    %430 = vrot.lane.b32.xlu0 %v427, 112
    %v431 = vpop.permute.xlu0 %430
    %v434 = vsel %vm420, %v429, 0.0
    %v435 = vsel %vm420, %v431, 0.0
    %v436 = vadd.f32 %v416, %v434
    %v437 = vadd.f32 %v417, %v435
    %v438 = vtanh.pop %v436
    %v439 = vtanh.pop %v437
    %v440 = vld [vmem:[%s5] sm:$0xff]
    %vm441 = vcmask 64512
    %v443 = vsel %vm441, %v438, 0
    %v446 = vsel %vm441, %v439, 0
    %448 = vmatprep.subr.mxu0 0.0
    %449 = vmatpush1.msra.mxu0 0.0
    %450 = vmatprep.subr.mxu0 0.0
    %451 = vmatpush1.msra.mxu0 0.0
    %452 = vmatprep.subr.mxu0 0.0
    %453 = vmatpush1.msra.mxu0 0.0
    %454 = vmatprep.subr.mxu0 0.0
    %455 = vmatpush1.msra.mxu0 0.0
    %456 = vmatprep.subr.mxu0 0.0
    %457 = vmatpush1.msra.mxu0 0.0
    %458 = vmatprep.subr.mxu0 0.0
    %459 = vmatpush1.msra.mxu0 0.0
    %460 = vmatprep.subr.mxu0 0.0
    %461 = vmatpush1.msra.mxu0 0.0
    %462 = vmatprep.subr.mxu0 0.0
    %463 = vmatpush1.msra.mxu0 0.0
    %464 = vmatprep.subr.mxu0 0.0
    %465 = vmatpush1.msra.mxu0 0.0
    %466 = vmatprep.subr.mxu0 0.0
    %467 = vmatpush1.msra.mxu0 0.0
    %468 = vmatprep.subr.mxu0 0.0
    %469 = vmatpush1.msra.mxu0 0.0
    %470 = vmatprep.subr.mxu0 0.0
    %471 = vmatpush1.msra.mxu0 0.0
    %472 = vmatprep.subr.mxu0 0.0
    %473 = vmatpush1.msra.mxu0 0.0
    %474 = vmatprep.subr.mxu0 0.0
    %475 = vmatpush1.msra.mxu0 0.0
    %476 = vmatprep.subr.mxu0 0.0
    %477 = vmatpush1.msra.mxu0 0.0
    %478 = vmatprep.subr.mxu0 0.0
    %479 = vmatpush1.msra.mxu0 %v440
    %480 = vmatprep.subr.mxu0 0.0
    %481 = vmatpush2.msra.mxu0 0.0
    %482 = vmatprep.subr.mxu0 0.0
    %483 = vmatpush2.msra.mxu0 0.0
    %484 = vmatprep.subr.mxu0 0.0
    %485 = vmatpush2.msra.mxu0 0.0
    %486 = vmatprep.subr.mxu0 0.0
    %487 = vmatpush2.msra.mxu0 0.0
    %488 = vmatprep.subr.mxu0 0.0
    %489 = vmatpush2.msra.mxu0 0.0
    %490 = vmatprep.subr.mxu0 0.0
    %491 = vmatpush2.msra.mxu0 0.0
    %492 = vmatprep.subr.mxu0 0.0
    %493 = vmatpush2.msra.mxu0 0.0
    %494 = vmatprep.subr.mxu0 0.0
    %495 = vmatpush2.msra.mxu0 0.0
    %496 = vmatprep.subr.mxu0 0.0
    %497 = vmatpush2.msra.mxu0 0.0
    %498 = vmatprep.subr.mxu0 0.0
    %499 = vmatpush2.msra.mxu0 0.0
    %500 = vmatprep.subr.mxu0 0.0
    %501 = vmatpush2.msra.mxu0 0.0
    %502 = vmatprep.subr.mxu0 0.0
    %503 = vmatpush2.msra.mxu0 0.0
    %504 = vmatprep.subr.mxu0 0.0
    %505 = vmatpush2.msra.mxu0 0.0
    %506 = vmatprep.subr.mxu0 0.0
    %507 = vmatpush2.msra.mxu0 0.0
    %508 = vmatprep.subr.mxu0 0.0
    %509 = vmatpush2.msra.mxu0 0.0
    %510 = vmatprep.subr.mxu0 0.0
    %511 = vmatpush2.msra.mxu0 0.0
    %512 = vmatprep.mubr.f32.mxu0 0.0
    %513 = vmatmul.mubr.f32.gmra.mxu0 %v443
    %v514 = vpop.f32.mrf.mxu0
    %v515 = vadd.f32 0.0, %v514
    %v516 = vpop.f32.mrf.mxu0
    %517 = vmatprep.mubr.f32.mxu0 0.0
    %518 = vmatmul.mubr.f32.gmra.mxu0 %v446
    %v519 = vpop.f32.mrf.mxu0
    %v520 = vadd.f32 0.0, %v519
    %v521 = vpop.f32.mrf.mxu0
    %522 = vdwg.mxu0
    %v523 = vld [vmem:[%s6] sm:$0xf]
    %vm524 = vcmask 31744
    %v526 = vsel %vm524, %v515, 0
    %v529 = vsel %vm524, %v520, 0
    %vm531 = vcmask 1043456
    %v533 = vsel %vm531, %v523, 0
    %535 = vmatprep.subr.mxu0 0.0
    %536 = vmatpush1.msra.mxu0 0.0
    %537 = vmatprep.subr.mxu0 0.0
    %538 = vmatpush1.msra.mxu0 0.0
    %539 = vmatprep.subr.mxu0 0.0
    %540 = vmatpush1.msra.mxu0 0.0
    %541 = vmatprep.subr.mxu0 0.0
    %542 = vmatpush1.msra.mxu0 0.0
    %543 = vmatprep.subr.mxu0 0.0
    %544 = vmatpush1.msra.mxu0 0.0
    %545 = vmatprep.subr.mxu0 0.0
    %546 = vmatpush1.msra.mxu0 0.0
    %547 = vmatprep.subr.mxu0 0.0
    %548 = vmatpush1.msra.mxu0 0.0
    %549 = vmatprep.subr.mxu0 0.0
    %550 = vmatpush1.msra.mxu0 0.0
    %551 = vmatprep.subr.mxu0 0.0
    %552 = vmatpush1.msra.mxu0 0.0
    %553 = vmatprep.subr.mxu0 0.0
    %554 = vmatpush1.msra.mxu0 0.0
    %555 = vmatprep.subr.mxu0 0.0
    %556 = vmatpush1.msra.mxu0 0.0
    %557 = vmatprep.subr.mxu0 0.0
    %558 = vmatpush1.msra.mxu0 0.0
    %559 = vmatprep.subr.mxu0 0.0
    %560 = vmatpush1.msra.mxu0 0.0
    %561 = vmatprep.subr.mxu0 0.0
    %562 = vmatpush1.msra.mxu0 0.0
    %563 = vmatprep.subr.mxu0 0.0
    %564 = vmatpush1.msra.mxu0 0.0
    %565 = vmatprep.subr.mxu0 0.0
    %566 = vmatpush1.msra.mxu0 %v533
    %567 = vmatprep.subr.mxu0 0.0
    %568 = vmatpush2.msra.mxu0 0.0
    %569 = vmatprep.subr.mxu0 0.0
    %570 = vmatpush2.msra.mxu0 0.0
    %571 = vmatprep.subr.mxu0 0.0
    %572 = vmatpush2.msra.mxu0 0.0
    %573 = vmatprep.subr.mxu0 0.0
    %574 = vmatpush2.msra.mxu0 0.0
    %575 = vmatprep.subr.mxu0 0.0
    %576 = vmatpush2.msra.mxu0 0.0
    %577 = vmatprep.subr.mxu0 0.0
    %578 = vmatpush2.msra.mxu0 0.0
    %579 = vmatprep.subr.mxu0 0.0
    %580 = vmatpush2.msra.mxu0 0.0
    %581 = vmatprep.subr.mxu0 0.0
    %582 = vmatpush2.msra.mxu0 0.0
    %583 = vmatprep.subr.mxu0 0.0
    %584 = vmatpush2.msra.mxu0 0.0
    %585 = vmatprep.subr.mxu0 0.0
    %586 = vmatpush2.msra.mxu0 0.0
    %587 = vmatprep.subr.mxu0 0.0
    %588 = vmatpush2.msra.mxu0 0.0
    %589 = vmatprep.subr.mxu0 0.0
    %590 = vmatpush2.msra.mxu0 0.0
    %591 = vmatprep.subr.mxu0 0.0
    %592 = vmatpush2.msra.mxu0 0.0
    %593 = vmatprep.subr.mxu0 0.0
    %594 = vmatpush2.msra.mxu0 0.0
    %595 = vmatprep.subr.mxu0 0.0
    %596 = vmatpush2.msra.mxu0 0.0
    %597 = vmatprep.subr.mxu0 0.0
    %598 = vmatpush2.msra.mxu0 0.0
    %599 = vmatprep.mubr.f32.mxu0 0.0
    %600 = vmatmul.mubr.f32.gmra.mxu0 %v526
    %v601 = vpop.f32.mrf.mxu0
    %v602 = vadd.f32 0.0, %v601
    %v603 = vpop.f32.mrf.mxu0
    %604 = vmatprep.mubr.f32.mxu0 0.0
    %605 = vmatmul.mubr.f32.gmra.mxu0 %v529
    %v606 = vpop.f32.mrf.mxu0
    %v607 = vadd.f32 0.0, %v606
    %v608 = vpop.f32.mrf.mxu0
    %609 = vdwg.mxu0
    %v610 = vsel %vm441, %v602, -inf
    %v611 = vrot.slane %v610, 4
    %v612 = vmax.f32 %v610, %v611
    %v613 = vrot.slane %v612, 2
    %v614 = vmax.f32 %v612, %v613
    %v615 = vrot.slane %v614, 1
    %v616 = vmax.f32 %v614, %v615
    %v617 = vsel %vm441, %v607, -inf
    %v618 = vrot.slane %v617, 4
    %v619 = vmax.f32 %v617, %v618
    %v620 = vrot.slane %v619, 2
    %v621 = vmax.f32 %v619, %v620
    %v622 = vrot.slane %v621, 1
    %v623 = vmax.f32 %v621, %v622
    %v624 = vsub.f32 %v602, %v616
    %v625 = vsub.f32 %v607, %v623
    %v626 = vmul.f32 %v624, 1.442695
    %v627 = vpow.pop %v626
    %v628 = vmul.f32 %v625, 1.442695
    %v629 = vpow.pop %v628
    %v630 = vsel %vm441, %v627, 0.0
    %v631 = vrot.slane %v630, 4
    %v632 = vadd.f32 %v630, %v631
    %v633 = vrot.slane %v632, 2
    %v634 = vadd.f32 %v632, %v633
    %v635 = vrot.slane %v634, 1
    %v636 = vadd.f32 %v634, %v635
    %v637 = vsel %vm441, %v629, 0.0
    %v638 = vrot.slane %v637, 4
    %v639 = vadd.f32 %v637, %v638
    %v640 = vrot.slane %v639, 2
    %v641 = vadd.f32 %v639, %v640
    %v642 = vrot.slane %v641, 1
    %v643 = vadd.f32 %v641, %v642
    %v644 = vrcp.pop %v636
    %v645 = vrcp.pop %v643
    %v646 = vmul.f32 %v627, %v644
    %v647 = vmul.f32 %v629, %v645
    %v648 = vmul.f32 %v438, %v646
    %v649 = vmul.f32 %v439, %v647
    %v650 = vsel %vm441, %v648, -inf
    %v651 = vrot.slane %v650, 4
    %v652 = vmax.f32 %v650, %v651
    %v653 = vrot.slane %v652, 2
    %v654 = vmax.f32 %v652, %v653
    %v655 = vrot.slane %v654, 1
    %v656 = vmax.f32 %v654, %v655
    %v657 = vsel %vm441, %v649, -inf
    %v658 = vrot.slane %v657, 4
    %v659 = vmax.f32 %v657, %v658
    %v660 = vrot.slane %v659, 2
    %v661 = vmax.f32 %v659, %v660
    %v662 = vrot.slane %v661, 1
    %v663 = vmax.f32 %v661, %v662
    %vm666 = vcmask 1041409
    %v667 = vsel %vm666, %v663, %v656
    %vm669 = vcmask 58368
    %670 = vst.msk [vmem:[#allocation9] sm:$0x3] %vm669, %v667
    // Predicated region
    $region42: #{tpu_custom_call.1} parent=1 // pred_check
      _
    $region43: #{tpu_custom_call.1} parent=1 // pred_check_branch
      %672 = sbr.rel (0) target = $region45
    $region44: #{tpu_custom_call.1} parent=1 // pred_region
      %s674 = ssub.s32 32, 32
      %675 = vsyncadd [#allocation5], %s674
      %s677 = sshll.u32 [#allocation9], 4
      %s678 = int_to_ptr.vmem [resolvable:$true] %s677
      %680 = dma.vmem_to_hbm [thread:$0]  %s678, 32, %s7, [#allocation5]
    $region45: #{tpu_custom_call.1} parent=1 // pred_fallthru
      _
    // Predicated region
    $region46: #{tpu_custom_call.1} parent=1 // pred_check
      _
    $region47: #{tpu_custom_call.1} parent=1 // pred_check_branch
      %682 = sbr.rel (0) target = $region49
    $region48: #{tpu_custom_call.1} parent=1 // pred_region
      %683 = dma.done [#allocation5], 32
    $region49: #{tpu_custom_call.1} parent=1 // pred_fallthru
      _
    %684 = vsyncpa [#allocation4], 1
    %685 = vsyncpa [#allocation7], 1
    %686 = vsyncpa [#allocation5], 1

</llo_original>
